<compile_context>
chip_gen: v7x
topology: tpu7x:2x2x1
jax: 0.10.0
libtpu: 0.0.40
codegen_flags: <defaults>
</compile_context>

<pallas_src>
import jax
import jax.numpy as jnp
from jax.experimental import pallas as pl
from jax.experimental.pallas import tpu as pltpu

_LANES = 128
_TARGET_BLOCK_BYTES = 2 * 1024 * 1024   # ~2 MiB per pipelined block (portable v5e/v6e/v7x)
_FAST_PATH_MAX_BYTES = 1 * 1024 * 1024  # below this the identity fast path always wins
_DMA_PATH_MIN_BYTES = 4 * 1024 * 1024   # above this, bypass VMEM with HBM->HBM DMAs
_MAX_DMA_CHUNKS = 8                     # few large DMA descriptors saturate copy BW


def _min_sublanes(dtype) -> int:
    """Minimum sublane multiple for a dtype: f32 -> 8, bf16 -> 16, int8/fp8 -> 32."""
    itemsize = jnp.dtype(dtype).itemsize
    return max(8, 32 // max(itemsize, 1))


def _flatten_lane_dense(x: jax.Array):
    """Flatten to a lane-dense (rows, 128) slab, zero-padding to a dtype-aware min tile."""
    sub = _min_sublanes(x.dtype)
    tile = sub * _LANES
    n = x.size
    flat = x.reshape(-1)
    pad = (-n) % tile
    if pad:
        flat = jnp.pad(flat, (0, pad))  # wrapper-side layout plumbing, not kernel work
    return flat.reshape(flat.size // _LANES, _LANES), n


def _unflatten(slab: jax.Array, n: int, shape) -> jax.Array:
    return slab.reshape(-1)[:n].reshape(shape)


# ----------------------------------------------------------------------------
# Path A: BlockSpec-pipelined VMEM copy (medium-sized constants).
# ----------------------------------------------------------------------------
def _copy_kernel(c_ref, o_ref):
    o_ref[...] = c_ref[...]


def _copy_blockspec(slab: jax.Array) -> jax.Array:
    rows, lanes = slab.shape
    dtype = slab.dtype
    sub = _min_sublanes(dtype)
    bytes_per_row = lanes * jnp.dtype(dtype).itemsize

    # Fixed ~2 MiB, sublane-aligned block; ragged last block handled by Pallas.
    block_rows = max(sub, (_TARGET_BLOCK_BYTES // bytes_per_row) // sub * sub)
    block_rows = min(block_rows, rows)
    grid = (pl.cdiv(rows, block_rows),)

    cost = pl.CostEstimate(flops=0, transcendentals=0, bytes_accessed=2 * slab.nbytes)
    # TODO(synk): on v7x with grid >= 2, pltpu.CORE_PARALLEL on this axis halves
    # ramp/drain for medium constants; plain "parallel" is a safe no-op elsewhere.
    return pl.pallas_call(
        _copy_kernel,
        out_shape=jax.ShapeDtypeStruct((rows, lanes), dtype),
        grid=grid,
        in_specs=[pl.BlockSpec((block_rows, lanes), lambda i: (i, 0))],
        out_specs=pl.BlockSpec((block_rows, lanes), lambda i: (i, 0)),
        compiler_params=pltpu.CompilerParams(dimension_semantics=("parallel",)),
        cost_estimate=cost,
    )(slab)


# ----------------------------------------------------------------------------
# Path B: HBM->HBM DMA copy (large constants) — no VMEM bounce at all.
# ----------------------------------------------------------------------------
def _copy_hbm_dma(slab: jax.Array) -> jax.Array:
    rows, lanes = slab.shape
    dtype = slab.dtype
    sub = _min_sublanes(dtype)

    # Static (trace-time) chunk boundaries along the row axis, sublane-aligned.
    n_chunks = min(_MAX_DMA_CHUNKS, max(1, rows // sub))
    chunks = []
    start = 0
    for c in range(n_chunks):
        remaining_rows = rows - start
        remaining_chunks = n_chunks - c
        size = -(-remaining_rows // remaining_chunks)      # ceil split
        size = -(-size // sub) * sub                       # round up to sublane multiple
        size = min(size, remaining_rows)
        if size > 0:
            chunks.append((start, size))
        start += size

    def kernel(src_ref, dst_ref, sems):
        # Issue all HBM->HBM DMAs, then drain.  No VMEM, no pipelining overhead.
        for idx, (s, z) in enumerate(chunks):
            pltpu.make_async_copy(
                src_ref.at[pl.ds(s, z), :], dst_ref.at[pl.ds(s, z), :], sems.at[idx]
            ).start()
        for idx, (s, z) in enumerate(chunks):
            pltpu.make_async_copy(
                src_ref.at[pl.ds(s, z), :], dst_ref.at[pl.ds(s, z), :], sems.at[idx]
            ).wait()

    cost = pl.CostEstimate(flops=0, transcendentals=0, bytes_accessed=2 * slab.nbytes)
    return pl.pallas_call(
        kernel,
        out_shape=jax.ShapeDtypeStruct((rows, lanes), dtype),
        in_specs=[pl.BlockSpec(memory_space=pl.ANY)],
        out_specs=pl.BlockSpec(memory_space=pl.ANY),
        scratch_shapes=[pltpu.SemaphoreType.DMA((len(chunks),))],
        cost_estimate=cost,
    )(slab)


# ----------------------------------------------------------------------------
# Public forward.
# ----------------------------------------------------------------------------
def constant_forward(constant: jax.Array, *, force_copy: bool = False,
                     use_dma: bool | None = None) -> jax.Array:
    """Forward for Constant.

    Default: zero-cost fast path — forward() is the identity on the parameter,
    so for anything small (the real StyleGAN case) no kernel is launched.
    `force_copy=True` materializes a fresh buffer via the Pallas copy kernels.
    """
    if not force_copy and constant.nbytes <= _FAST_PATH_MAX_BYTES:
        return constant

    shape = constant.shape
    slab, n = _flatten_lane_dense(constant)
    if use_dma is None:
        use_dma = slab.nbytes >= _DMA_PATH_MIN_BYTES
    out = _copy_hbm_dma(slab) if use_dma else _copy_blockspec(slab)
    return _unflatten(out, n, shape)


class Constant:
    """JAX mirror of the PyTorch Constant module."""

    def __init__(self, fdim: int, size: tuple, key: jax.Array):
        # torch.randn((1, fdim) + size) -> standard normal init
        self.constant = jax.random.normal(
            key, (1, fdim) + tuple(size), dtype=jnp.float32
        )

    def __call__(self) -> jax.Array:
        # forward() is the identity on the parameter: zero-cost fast path.
        return constant_forward(self.constant)


if __name__ == "__main__":
    key = jax.random.PRNGKey(0)
    fdim, size = 4, (16, 16)
    module = Constant(fdim, size, key)

    # 1) Real forward: fast path (no kernel — identity on the parameter).
    out = jax.block_until_ready(module())
    assert out.shape == (1, fdim) + size, out.shape
    assert out.dtype == jnp.float32
    assert bool(jnp.array_equal(out, module.constant))

    # 2) Exercise both Pallas materialized-copy paths once and check exactness.
    out_vmem = jax.block_until_ready(
        constant_forward(module.constant, force_copy=True, use_dma=False)
    )
    out_dma = jax.block_until_ready(
        constant_forward(module.constant, force_copy=True, use_dma=True)
    )
    assert out_vmem.shape == out.shape and out_dma.shape == out.shape
    assert bool(jnp.array_equal(out_vmem, module.constant))
    assert bool(jnp.array_equal(out_dma, module.constant))

    print("KERNEL_OK")
</pallas_src>

<mosaic_0001>
module attributes {stable_mosaic.version = 11 : i64} {
  func.func @_copy_kernel(%arg0: i32, %arg1: memref<8x128xf32, #tpu.memory_space<vmem>>, %arg2: memref<8x128xf32, #tpu.memory_space<vmem>>) attributes {dimension_semantics = [#tpu.dimension_semantics<parallel>], iteration_bounds = array<i64: 1>, scalar_prefetch = 0 : i64, scratch_operands = 0 : i64, tpu.core_type = #tpu.core_type<tc>, window_params = [{transform_indices = @transform_0, window_bounds = array<i64: 8, 128>}, {transform_indices = @transform_1, window_bounds = array<i64: 8, 128>}]} {
    %c0 = arith.constant 0 : index
    %c0_0 = arith.constant 0 : index
    %0 = vector.load %arg1[%c0, %c0_0] : memref<8x128xf32, #tpu.memory_space<vmem>>, vector<8x128xf32>
    %c0_1 = arith.constant 0 : index
    %c0_2 = arith.constant 0 : index
    %1 = vector.load %arg2[%c0_1, %c0_2] : memref<8x128xf32, #tpu.memory_space<vmem>>, vector<8x128xf32>
    tpu.vector_store %arg2[%c0_1, %c0_2], %0 {strides = array<i32>} : memref<8x128xf32, #tpu.memory_space<vmem>>, vector<8x128xf32>,
    return
  }
  func.func @transform_0(%arg0: i32) -> (i32, i32) {
    %c0_i32 = arith.constant 0 : i32
    %c0_i32_0 = arith.constant 0 : i32
    return %arg0, %c0_i32 : i32, i32
  }
  func.func @transform_1(%arg0: i32) -> (i32, i32) {
    %c0_i32 = arith.constant 0 : i32
    %c0_i32_0 = arith.constant 0 : i32
    return %arg0, %c0_i32 : i32, i32
  }
}

</mosaic_0001>

<llo_original>
// kernel: tpu_custom_call.1
$region0: #{tpu_custom_call.1}
  #allocation0 [shape = 'u32[]', space=smem, size = 0x4, offset = 0x4, fixed_abs, tag = 'smem constant byte address 0x4 - core index']
  #allocation1 [shape = 'u32[144,128]{1,0:T(1,128)}', space=vmem, size = 0x12000, scoped, tag = 'internal scratch']
  %s0 = inlined_call_operand.hbm [shape: f32[8,128], index: 0, kind: input, shape index: {}]
  %s1 = inlined_call_operand.hbm [shape: f32[8,128], index: 1, kind: output, shape index: {}]
  %s2 = sld [smem:[#allocation0]]
  $region18: #{tpu_custom_call.1} parent=0
    _
  %s4 = ssub.s32 1, %s2
  %s5 = scalar_select 0, %s4, %s2
  $region1: #{tpu_custom_call.1} parent=0
    #allocation2 [shape = 'u8[4096]{0}', space=vmem, size = 0x1000, scoped, tag = 'input window, operand 0, single buffered']
    #allocation3 [shape = 's32[1]{0}', space=sflag, size = 0x4, scoped, tag = 'scoped memory for tpu_custom_call.1']
    #allocation4 [shape = 's32[1]{0}', space=sflag, size = 0x4, scoped, tag = 'scoped memory for tpu_custom_call.1']
    #allocation5 [shape = 'u8[4096]{0}', space=vmem, size = 0x1000, scoped, tag = 'output window, operand 0, single buffered']
    %6 = vsyncpa [#allocation3], 0
    %7 = vsyncpa [#allocation4], 0
    // Predicated region
    $region2: #{tpu_custom_call.1} parent=1 // pred_check
      _
    $region3: #{tpu_custom_call.1} parent=1 // pred_check_branch
      %9 = sbr.rel (0) target = $region5
    $region4: #{tpu_custom_call.1} parent=1 // pred_region
      %s11 = ssub.s32 128, 128
      %12 = vsyncadd [#allocation3], %s11
      %s14 = sshll.u32 [#allocation2], 4
      %s15 = int_to_ptr.vmem [resolvable:$true] %s14
      %17 = dma.hbm_to_vmem [thread:$0]  %s0, 128, %s15, [#allocation3]
    $region5: #{tpu_custom_call.1} parent=1 // pred_fallthru
      _
    // Predicated region
    $region6: #{tpu_custom_call.1} parent=1 // pred_check
      _
    $region7: #{tpu_custom_call.1} parent=1 // pred_check_branch
      %19 = sbr.rel (0) target = $region9
    $region8: #{tpu_custom_call.1} parent=1 // pred_region
      %20 = dma.done [#allocation3], 128
    $region9: #{tpu_custom_call.1} parent=1 // pred_fallthru
      _
    %v21 = vld [vmem:[#allocation2] sm:$0xff]
    %22 = vst [vmem:[#allocation5] sm:$0xff] %v21
    // Predicated region
    $region10: #{tpu_custom_call.1} parent=1 // pred_check
      _
    $region11: #{tpu_custom_call.1} parent=1 // pred_check_branch
      %24 = sbr.rel (0) target = $region13
    $region12: #{tpu_custom_call.1} parent=1 // pred_region
      %s26 = ssub.s32 128, 128
      %27 = vsyncadd [#allocation4], %s26
      %s29 = sshll.u32 [#allocation5], 4
      %s30 = int_to_ptr.vmem [resolvable:$true] %s29
      %32 = dma.vmem_to_hbm [thread:$0]  %s30, 128, %s1, [#allocation4]
    $region13: #{tpu_custom_call.1} parent=1 // pred_fallthru
      _
    // Predicated region
    $region14: #{tpu_custom_call.1} parent=1 // pred_check
      _
    $region15: #{tpu_custom_call.1} parent=1 // pred_check_branch
      %34 = sbr.rel (0) target = $region17
    $region16: #{tpu_custom_call.1} parent=1 // pred_region
      %35 = dma.done [#allocation4], 128
    $region17: #{tpu_custom_call.1} parent=1 // pred_fallthru
      _
    %36 = vsyncpa [#allocation3], 1
    %37 = vsyncpa [#allocation4], 1

</llo_original>
